<compile_context>
chip_gen: v7x
topology: tpu7x:2x2x1
jax: 0.10.0
libtpu: 0.0.40
codegen_flags: <defaults>
</compile_context>

<pallas_src>
import functools

import jax
import jax.numpy as jnp
from jax.experimental import pallas as pl
from jax.experimental.pallas import tpu as pltpu

LANE = 128


def _round_up(x, m):
    return ((x + m - 1) // m) * m


# ----------------------------------------------------------------------------
# Kernel: head(CLS) = Linear -> ReLU -> (Identity) -> Linear
# ----------------------------------------------------------------------------
def classifier_head_kernel(cls_ref, w1_ref, b1_ref, w2_ref, b2_ref, out_ref):
    # cls_ref : (TILE_B, H)   f32 CLS activations (cast to bf16 in-body)
    # w1_ref  : (H, Cp)       bf16,  b1_ref : (1, Cp) f32
    # w2_ref  : (Cp, Lp)      bf16,  b2_ref : (1, Lp) f32
    # out_ref : (TILE_B, Lp)  f32 (lane-dense, Lp multiple of 128)
    x = cls_ref[...].astype(jnp.bfloat16)                  # VPU cast, hides under DMA/MXU
    h = jnp.dot(x, w1_ref[...], preferred_element_type=jnp.float32)
    h = jnp.maximum(h + b1_ref[...], 0.0)                  # bias + ReLU in f32 (Dropout = Identity)
    logits = jnp.dot(h.astype(w2_ref.dtype), w2_ref[...],
                     preferred_element_type=jnp.float32)
    out_ref[...] = logits + b2_ref[...]


def prepare_head_params(w1, b1, w2, b2):
    """One-time (init-time) lane-padding + bf16 cast of the head weights.

    Zero padding is exact: padded hidden cols are ReLU(0 + 0) = 0 and padded w2
    rows/cols are 0, so they contribute nothing to the real logits.
    """
    H, C = w1.shape
    L = w2.shape[1]
    Cp = _round_up(max(C, LANE), LANE)
    Lp = _round_up(max(L, LANE), LANE)
    return {
        "w1p": jnp.zeros((H, Cp), jnp.bfloat16).at[:, :C].set(w1.astype(jnp.bfloat16)),
        "b1p": jnp.zeros((1, Cp), jnp.float32).at[0, :C].set(b1.astype(jnp.float32)),
        "w2p": jnp.zeros((Cp, Lp), jnp.bfloat16).at[:C, :L].set(w2.astype(jnp.bfloat16)),
        "b2p": jnp.zeros((1, Lp), jnp.float32).at[0, :L].set(b2.astype(jnp.float32)),
        "num_labels": int(L),
    }


@functools.partial(jax.jit, static_argnames=("num_labels", "tile_b"))
def classifier_head(cls_state, w1p, b1p, w2p, b2p, *, num_labels, tile_b=None):
    """head(CLS) batched over a parallel grid axis. Weights arrive pre-padded in bf16."""
    B, H = cls_state.shape
    Cp = w1p.shape[1]
    Lp = w2p.shape[1]

    if tile_b is None:
        # >=2 grid steps when B allows (so v7x's second TensorCore engages), rows a
        # multiple of 16 (bf16 sublane granule / MXU-M fill), capped at 128 per step,
        # and never larger than the (8-row-rounded) batch itself.
        tile_b = max(16, min(128, _round_up(pl.cdiv(B, 2), 16)))
        tile_b = min(tile_b, _round_up(B, 8))

    grid = (pl.cdiv(B, tile_b),)                            # ragged last block handled by Pallas
    rep = lambda shape: pl.BlockSpec(shape, lambda b: (0, 0))   # replicated weights / biases

    out = pl.pallas_call(
        classifier_head_kernel,
        out_shape=jax.ShapeDtypeStruct((B, Lp), jnp.float32),
        grid=grid,
        in_specs=[
            pl.BlockSpec((tile_b, H), lambda b: (b, 0)),    # CLS activations, pipelined over batch
            rep((H, Cp)),
            rep((1, Cp)),
            rep((Cp, Lp)),
            rep((1, Lp)),
        ],
        out_specs=pl.BlockSpec((tile_b, Lp), lambda b: (b, 0)),
        compiler_params=pltpu.CompilerParams(
            dimension_semantics=("parallel",)),
    )(cls_state, w1p, b1p, w2p, b2p)

    return out[:, :num_labels]


def distilbert_custom_classifier_forward(params, input_ids, attention_mask):
    """Forward pass mirroring DistilbertCustomClassifier.forward."""
    # --- "bert_model" stand-in (plain JAX glue): deterministic embedding lookup.
    # The real encoder consumes attention_mask inside its attention layers; it does NOT
    # zero the output hidden states, so no masking is applied here.
    # TODO(synk): replace with a real DistilBERT encoder; it is an external nn.Module.
    del attention_mask
    # Only the CLS (position 0) hidden state feeds the head -> gather just that row.
    cls_state = params["embedding"][input_ids[:, 0]]        # (B, H) f32

    hp = params["head_padded"]
    return classifier_head(cls_state, hp["w1p"], hp["b1p"], hp["w2p"], hp["b2p"],
                           num_labels=hp["num_labels"])


def init_params(key, vocab_size=128, bert_hidden_dim=128,
                classifier_hidden_dim=32, num_labels=1):
    k_emb, k_w1, k_b1, k_w2, k_b2 = jax.random.split(key, 5)
    # PyTorch-Linear-like uniform init: U(-1/sqrt(fan_in), 1/sqrt(fan_in))
    bound1 = 1.0 / (bert_hidden_dim ** 0.5)
    bound2 = 1.0 / (classifier_hidden_dim ** 0.5)
    params = {
        "embedding": jax.random.normal(k_emb, (vocab_size, bert_hidden_dim),
                                       dtype=jnp.float32) * 0.02,
        "w1": jax.random.uniform(k_w1, (bert_hidden_dim, classifier_hidden_dim),
                                 minval=-bound1, maxval=bound1, dtype=jnp.float32),
        "b1": jax.random.uniform(k_b1, (classifier_hidden_dim,),
                                 minval=-bound1, maxval=bound1, dtype=jnp.float32),
        "w2": jax.random.uniform(k_w2, (classifier_hidden_dim, num_labels),
                                 minval=-bound2, maxval=bound2, dtype=jnp.float32),
        "b2": jax.random.uniform(k_b2, (num_labels,),
                                 minval=-bound2, maxval=bound2, dtype=jnp.float32),
    }
    # Pad/cast the head weights exactly once, outside the per-call forward path.
    params["head_padded"] = prepare_head_params(params["w1"], params["b1"],
                                                params["w2"], params["b2"])
    return params


if __name__ == "__main__":
    key = jax.random.PRNGKey(0)
    k_params, k_ids = jax.random.split(key)

    B, S = 8, 8            # batch, sequence length
    H, C, L = 128, 32, 1   # bert_hidden_dim, classifier_hidden_dim, num_labels
    VOCAB = 128

    params = init_params(k_params, vocab_size=VOCAB, bert_hidden_dim=H,
                         classifier_hidden_dim=C, num_labels=L)

    input_ids = jax.random.randint(k_ids, (B, S), 0, VOCAB, dtype=jnp.int32)
    attention_mask = jnp.ones((B, S), dtype=jnp.int32)

    logits = distilbert_custom_classifier_forward(params, input_ids, attention_mask)
    logits = jax.block_until_ready(logits)

    # Sanity check against a plain-JAX reference of the head (bf16 matmuls, f32 accum,
    # matching the kernel's numerics).
    cls = params["embedding"][input_ids[:, 0]]
    h_ref = jnp.dot(cls.astype(jnp.bfloat16), params["w1"].astype(jnp.bfloat16),
                    preferred_element_type=jnp.float32) + params["b1"]
    h_ref = jnp.maximum(h_ref, 0.0)
    ref = jnp.dot(h_ref.astype(jnp.bfloat16), params["w2"].astype(jnp.bfloat16),
                  preferred_element_type=jnp.float32) + params["b2"]

    assert logits.shape == (B, L)
    assert jnp.allclose(logits, ref, atol=5e-3, rtol=5e-3), (logits, ref)

    print("KERNEL_OK")
</pallas_src>

<mosaic_0001>
module attributes {stable_mosaic.version = 11 : i64} {
  func.func @classifier_head_kernel(%arg0: i32, %arg1: memref<8x128xf32, #tpu.memory_space<vmem>>, %arg2: memref<128x128xbf16, #tpu.memory_space<vmem>>, %arg3: memref<1x128xf32, #tpu.memory_space<vmem>>, %arg4: memref<128x128xbf16, #tpu.memory_space<vmem>>, %arg5: memref<1x128xf32, #tpu.memory_space<vmem>>, %arg6: memref<8x128xf32, #tpu.memory_space<vmem>>) attributes {dimension_semantics = [#tpu.dimension_semantics<parallel>], iteration_bounds = array<i64: 1>, scalar_prefetch = 0 : i64, scratch_operands = 0 : i64, tpu.core_type = #tpu.core_type<tc>, window_params = [{transform_indices = @transform_0, window_bounds = array<i64: 8, 128>}, {pipeline_mode = #tpu.pipeline_mode<synchronous>, transform_indices = @transform_1, window_bounds = array<i64: 128, 128>}, {pipeline_mode = #tpu.pipeline_mode<synchronous>, transform_indices = @transform_2, window_bounds = array<i64: 1, 128>}, {pipeline_mode = #tpu.pipeline_mode<synchronous>, transform_indices = @transform_3, window_bounds = array<i64: 128, 128>}, {pipeline_mode = #tpu.pipeline_mode<synchronous>, transform_indices = @transform_4, window_bounds = array<i64: 1, 128>}, {transform_indices = @transform_5, window_bounds = array<i64: 8, 128>}]} {
    %c0 = arith.constant 0 : index
    %c0_0 = arith.constant 0 : index
    %0 = vector.load %arg1[%c0, %c0_0] : memref<8x128xf32, #tpu.memory_space<vmem>>, vector<8x128xf32>
    %1 = arith.truncf %0 : vector<8x128xf32> to vector<8x128xbf16>
    %c0_1 = arith.constant 0 : index
    %c0_2 = arith.constant 0 : index
    %2 = vector.load %arg2[%c0_1, %c0_2] : memref<128x128xbf16, #tpu.memory_space<vmem>>, vector<128x128xbf16>
    %cst = arith.constant dense<0.000000e+00> : vector<8x128xf32>
    %3 = tpu.matmul %1, %2, %cst {dimension_numbers = #tpu.dot_dimension_numbers<[1], [0], [0], [1], [0, 0, 1, 1], [], []>} : vector<8x128xbf16>, vector<128x128xbf16>, vector<8x128xf32> -> vector<8x128xf32>
    %c0_3 = arith.constant 0 : index
    %c0_4 = arith.constant 0 : index
    %4 = vector.load %arg3[%c0_3, %c0_4] : memref<1x128xf32, #tpu.memory_space<vmem>>, vector<1x128xf32>
    %5 = vector.broadcast %4 : vector<1x128xf32> to vector<8x128xf32>
    %6 = arith.addf %3, %5 : vector<8x128xf32>
    %cst_5 = arith.constant 0.000000e+00 : f32
    %7 = vector.broadcast %cst_5 : f32 to vector<8x128xf32>
    %8 = arith.maximumf %6, %7 : vector<8x128xf32>
    %9 = arith.truncf %8 : vector<8x128xf32> to vector<8x128xbf16>
    %c0_6 = arith.constant 0 : index
    %c0_7 = arith.constant 0 : index
    %10 = vector.load %arg4[%c0_6, %c0_7] : memref<128x128xbf16, #tpu.memory_space<vmem>>, vector<128x128xbf16>
    %cst_8 = arith.constant dense<0.000000e+00> : vector<8x128xf32>
    %11 = tpu.matmul %9, %10, %cst_8 {dimension_numbers = #tpu.dot_dimension_numbers<[1], [0], [0], [1], [0, 0, 1, 1], [], []>} : vector<8x128xbf16>, vector<128x128xbf16>, vector<8x128xf32> -> vector<8x128xf32>
    %c0_9 = arith.constant 0 : index
    %c0_10 = arith.constant 0 : index
    %12 = vector.load %arg5[%c0_9, %c0_10] : memref<1x128xf32, #tpu.memory_space<vmem>>, vector<1x128xf32>
    %13 = vector.broadcast %12 : vector<1x128xf32> to vector<8x128xf32>
    %14 = arith.addf %11, %13 : vector<8x128xf32>
    %c0_11 = arith.constant 0 : index
    %c0_12 = arith.constant 0 : index
    %15 = vector.load %arg6[%c0_11, %c0_12] : memref<8x128xf32, #tpu.memory_space<vmem>>, vector<8x128xf32>
    tpu.vector_store %arg6[%c0_11, %c0_12], %14 {strides = array<i32>} : memref<8x128xf32, #tpu.memory_space<vmem>>, vector<8x128xf32>,
    return
  }
  func.func @transform_0(%arg0: i32) -> (i32, i32) {
    %c0_i32 = arith.constant 0 : i32
    %c0_i32_0 = arith.constant 0 : i32
    return %arg0, %c0_i32 : i32, i32
  }
  func.func @transform_1(%arg0: i32) -> (i32, i32) {
    %c0_i32 = arith.constant 0 : i32
    %c0_i32_0 = arith.constant 0 : i32
    %c0_i32_1 = arith.constant 0 : i32
    return %c0_i32, %c0_i32_0 : i32, i32
  }
  func.func @transform_2(%arg0: i32) -> (i32, i32) {
    %c0_i32 = arith.constant 0 : i32
    %c0_i32_0 = arith.constant 0 : i32
    %c0_i32_1 = arith.constant 0 : i32
    return %c0_i32, %c0_i32_0 : i32, i32
  }
  func.func @transform_3(%arg0: i32) -> (i32, i32) {
    %c0_i32 = arith.constant 0 : i32
    %c0_i32_0 = arith.constant 0 : i32
    %c0_i32_1 = arith.constant 0 : i32
    return %c0_i32, %c0_i32_0 : i32, i32
  }
  func.func @transform_4(%arg0: i32) -> (i32, i32) {
    %c0_i32 = arith.constant 0 : i32
    %c0_i32_0 = arith.constant 0 : i32
    %c0_i32_1 = arith.constant 0 : i32
    return %c0_i32, %c0_i32_0 : i32, i32
  }
  func.func @transform_5(%arg0: i32) -> (i32, i32) {
    %c0_i32 = arith.constant 0 : i32
    %c0_i32_0 = arith.constant 0 : i32
    return %arg0, %c0_i32 : i32, i32
  }
}

</mosaic_0001>

<llo_original>
// kernel: classifier_head.1
$region0: #{classifier_head.1}
  #allocation0 [shape = 'u32[]', space=smem, size = 0x4, offset = 0x4, fixed_abs, tag = 'smem constant byte address 0x4 - core index']
  #allocation1 [shape = 'u32[144,128]{1,0:T(1,128)}', space=vmem, size = 0x12000, scoped, tag = 'internal scratch']
  %s0 = inlined_call_operand.hbm [shape: f32[8,128], index: 0, kind: input, shape index: {}]
  %s1 = inlined_call_operand.hbm [shape: bf16[128,128], index: 1, kind: input, shape index: {}]
  %s2 = inlined_call_operand.vmem [shape: f32[1,128], index: 2, kind: input, shape index: {}]
  %s3 = inlined_call_operand.hbm [shape: bf16[128,128], index: 3, kind: input, shape index: {}]
  %s4 = inlined_call_operand.vmem [shape: f32[1,128], index: 4, kind: input, shape index: {}]
  %s5 = inlined_call_operand.vmem [shape: f32[8,128], index: 5, kind: output, shape index: {}]
  %s6 = sld [smem:[#allocation0]]
  $region42: #{classifier_head.1} parent=0
    _
  %s8 = ssub.s32 1, %s6
  %s9 = scalar_select 0, %s8, %s6
  $region1: #{classifier_head.1} parent=0
    #allocation2 [shape = 'u8[4096]{0}', space=vmem, size = 0x1000, scoped, tag = 'input window, operand 0, single buffered']
    #allocation3 [shape = 's32[1]{0}', space=sflag, size = 0x4, scoped, tag = 'scoped memory for classifier_head.1']
    #allocation4 [shape = 'u8[32768]{0}', space=vmem, size = 0x8000, scoped, tag = 'input window, operand 1, single buffered']
    #allocation5 [shape = 's32[1]{0}', space=sflag, size = 0x4, scoped, tag = 'scoped memory for classifier_head.1']
    #allocation6 [shape = 'u8[32768]{0}', space=vmem, size = 0x8000, scoped, tag = 'input window, operand 3, single buffered']
    %10 = vsyncpa [#allocation3], 0
    %11 = vsyncpa [#allocation5], 0
    // Predicated region
    $region2: #{classifier_head.1} parent=1 // pred_check
      _
    $region3: #{classifier_head.1} parent=1 // pred_check_branch
      %13 = sbr.rel (0) target = $region5
    $region4: #{classifier_head.1} parent=1 // pred_region
      %s15 = ssub.s32 128, 128
      %16 = vsyncadd [#allocation3], %s15
      %s18 = sshll.u32 [#allocation2], 4
      %s19 = int_to_ptr.vmem [resolvable:$true] %s18
      %21 = dma.hbm_to_vmem [thread:$0]  %s0, 128, %s19, [#allocation3]
    $region5: #{classifier_head.1} parent=1 // pred_fallthru
      _
    // Predicated region
    $region6: #{classifier_head.1} parent=1 // pred_check
      _
    $region7: #{classifier_head.1} parent=1 // pred_check_branch
      %23 = sbr.rel (0) target = $region9
    $region8: #{classifier_head.1} parent=1 // pred_region
      %s25 = ssub.s32 1024, 1024
      %26 = vsyncadd [#allocation5], %s25
      %s27 = sshll.u32 [#allocation4], 4
      %s28 = int_to_ptr.vmem [resolvable:$true] %s27
      %33 = dma.hbm_to_vmem [thread:$0]  %s1, 1024, %s28, [#allocation5], 64, 64, 4
    $region9: #{classifier_head.1} parent=1 // pred_fallthru
      _
    // Predicated region
    $region10: #{classifier_head.1} parent=1 // pred_check
      _
    $region11: #{classifier_head.1} parent=1 // pred_check_branch
      %35 = sbr.rel (0) target = $region13
    $region12: #{classifier_head.1} parent=1 // pred_region
      _
    $region13: #{classifier_head.1} parent=1 // pred_fallthru
      _
    // Predicated region
    $region14: #{classifier_head.1} parent=1 // pred_check
      _
    $region15: #{classifier_head.1} parent=1 // pred_check_branch
      %37 = sbr.rel (0) target = $region17
    $region16: #{classifier_head.1} parent=1 // pred_region
      %s39 = ssub.s32 1024, 1024
      %40 = vsyncadd [#allocation5], %s39
      %s41 = sshll.u32 [#allocation6], 4
      %s42 = int_to_ptr.vmem [resolvable:$true] %s41
      %47 = dma.hbm_to_vmem [thread:$0]  %s3, 1024, %s42, [#allocation5], 64, 64, 4
    $region17: #{classifier_head.1} parent=1 // pred_fallthru
      _
    // Predicated region
    $region18: #{classifier_head.1} parent=1 // pred_check
      _
    $region19: #{classifier_head.1} parent=1 // pred_check_branch
      %49 = sbr.rel (0) target = $region21
    $region20: #{classifier_head.1} parent=1 // pred_region
      _
    $region21: #{classifier_head.1} parent=1 // pred_fallthru
      _
    // Predicated region
    $region22: #{classifier_head.1} parent=1 // pred_check
      _
    $region23: #{classifier_head.1} parent=1 // pred_check_branch
      %51 = sbr.rel (0) target = $region25
    $region24: #{classifier_head.1} parent=1 // pred_region
      %52 = dma.done [#allocation3], 128
    $region25: #{classifier_head.1} parent=1 // pred_fallthru
      _
    // Predicated region
    $region26: #{classifier_head.1} parent=1 // pred_check
      _
    $region27: #{classifier_head.1} parent=1 // pred_check_branch
      %54 = sbr.rel (0) target = $region29
    $region28: #{classifier_head.1} parent=1 // pred_region
      %55 = dma.done [#allocation5], 1024
    $region29: #{classifier_head.1} parent=1 // pred_fallthru
      _
    // Predicated region
    $region30: #{classifier_head.1} parent=1 // pred_check
      _
    $region31: #{classifier_head.1} parent=1 // pred_check_branch
      %57 = sbr.rel (0) target = $region33
    $region32: #{classifier_head.1} parent=1 // pred_region
      %58 = dma.done [#allocation5], 1024
    $region33: #{classifier_head.1} parent=1 // pred_fallthru
      _
    %v60 = vld [vmem:[#allocation2] sm:$0xff]
    %v61 = vpack.c.bf16 %v60, %v60
    %v62 = vld [vmem:[#allocation4] sm:$0xf]
    %v63 = vld [vmem:[#allocation4 + $0x4] sm:$0xf]
    %v64 = vld [vmem:[#allocation4 + $0x8] sm:$0xf]
    %v65 = vld [vmem:[#allocation4 + $0xc] sm:$0xf]
    %v66 = vld [vmem:[#allocation4 + $0x10] sm:$0xf]
    %v67 = vld [vmem:[#allocation4 + $0x14] sm:$0xf]
    %v68 = vld [vmem:[#allocation4 + $0x18] sm:$0xf]
    %v69 = vld [vmem:[#allocation4 + $0x1c] sm:$0xf]
    %v70 = vld [vmem:[#allocation4 + $0x20] sm:$0xf]
    %v71 = vld [vmem:[#allocation4 + $0x24] sm:$0xf]
    %v72 = vld [vmem:[#allocation4 + $0x28] sm:$0xf]
    %v73 = vld [vmem:[#allocation4 + $0x2c] sm:$0xf]
    %v74 = vld [vmem:[#allocation4 + $0x30] sm:$0xf]
    %v75 = vld [vmem:[#allocation4 + $0x34] sm:$0xf]
    %v76 = vld [vmem:[#allocation4 + $0x38] sm:$0xf]
    %v77 = vld [vmem:[#allocation4 + $0x3c] sm:$0xf]
    %v78 = vld [vmem:[%s2] sm:$0x1]
    %v80 = vlaneseq
    %v81 = vshrl.u32 %v80, 7
    %v82 = vsub.s32 0, %v81
    %v83 = vrot.slane %v78, %v82
    %v101 = vunpack.c.l.b16 %v62
    %v102 = vunpack.c.l.b16 %v63
    %v103 = vunpack.c.l.b16 %v64
    %v104 = vunpack.c.l.b16 %v65
    %v105 = vunpack.c.l.b16 %v66
    %v106 = vunpack.c.l.b16 %v67
    %v107 = vunpack.c.l.b16 %v68
    %v108 = vunpack.c.l.b16 %v69
    %v109 = vunpack.c.l.b16 %v70
    %v110 = vunpack.c.l.b16 %v71
    %v111 = vunpack.c.l.b16 %v72
    %v112 = vunpack.c.l.b16 %v73
    %v113 = vunpack.c.l.b16 %v74
    %v114 = vunpack.c.l.b16 %v75
    %v115 = vunpack.c.l.b16 %v76
    %v116 = vunpack.c.l.b16 %v77
    %v117 = vpack.c.b16 %v102, %v101
    %v118 = vpack.c.b16 %v104, %v103
    %v119 = vpack.c.b16 %v106, %v105
    %v120 = vpack.c.b16 %v108, %v107
    %v121 = vpack.c.b16 %v110, %v109
    %v122 = vpack.c.b16 %v112, %v111
    %v123 = vpack.c.b16 %v114, %v113
    %v124 = vpack.c.b16 %v116, %v115
    %133 = vmatprep.subr.bf16.mxu0 0
    %134 = vmatpush1.bf16.msra.mxu0 %v117
    %135 = vmatprep.subr.bf16.mxu0 0
    %136 = vmatpush1.bf16.msra.mxu0 %v118
    %137 = vmatprep.subr.bf16.mxu0 0
    %138 = vmatpush1.bf16.msra.mxu0 %v119
    %139 = vmatprep.subr.bf16.mxu0 0
    %140 = vmatpush1.bf16.msra.mxu0 %v120
    %141 = vmatprep.subr.bf16.mxu0 0
    %142 = vmatpush1.bf16.msra.mxu0 %v121
    %143 = vmatprep.subr.bf16.mxu0 0
    %144 = vmatpush1.bf16.msra.mxu0 %v122
    %145 = vmatprep.subr.bf16.mxu0 0
    %146 = vmatpush1.bf16.msra.mxu0 %v123
    %147 = vmatprep.subr.bf16.mxu0 0
    %148 = vmatpush1.bf16.msra.mxu0 %v124
    %149 = vmatprep.subr.bf16.mxu0 0
    %150 = vmatpush1.bf16.msra.mxu0 0
    %151 = vmatprep.subr.bf16.mxu0 0
    %152 = vmatpush1.bf16.msra.mxu0 0
    %153 = vmatprep.subr.bf16.mxu0 0
    %154 = vmatpush1.bf16.msra.mxu0 0
    %155 = vmatprep.subr.bf16.mxu0 0
    %156 = vmatpush1.bf16.msra.mxu0 0
    %157 = vmatprep.subr.bf16.mxu0 0
    %158 = vmatpush1.bf16.msra.mxu0 0
    %159 = vmatprep.subr.bf16.mxu0 0
    %160 = vmatpush1.bf16.msra.mxu0 0
    %161 = vmatprep.subr.bf16.mxu0 0
    %162 = vmatpush1.bf16.msra.mxu0 0
    %163 = vmatprep.subr.bf16.mxu0 0
    %164 = vmatpush1.bf16.msra.mxu0 0
    %165 = vmatprep.mubr.bf16.mxu0 0
    %166 = vmatmul.mubr.bf16.gmra.mrb[0].mxu0 %v61
    %v167 = vpop.f32.mrb[0].mxu0
    %v168 = vadd.f32 %v83, %v167
    %v169 = vpop.f32.mrb[0].mxu0
    %v170 = vpop.f32.mrb[0].mxu0
    %v171 = vpop.f32.mrb[0].mxu0
    %172 = vdwg.mxu0
    %v173 = vmax.f32 %v168, 0.0
    %v174 = vpack.c.bf16 %v173, %v173
    %v175 = vld [vmem:[#allocation6] sm:$0xf]
    %v176 = vld [vmem:[#allocation6 + $0x4] sm:$0xf]
    %v177 = vld [vmem:[#allocation6 + $0x8] sm:$0xf]
    %v178 = vld [vmem:[#allocation6 + $0xc] sm:$0xf]
    %v179 = vld [vmem:[#allocation6 + $0x10] sm:$0xf]
    %v180 = vld [vmem:[#allocation6 + $0x14] sm:$0xf]
    %v181 = vld [vmem:[#allocation6 + $0x18] sm:$0xf]
    %v182 = vld [vmem:[#allocation6 + $0x1c] sm:$0xf]
    %v183 = vld [vmem:[#allocation6 + $0x20] sm:$0xf]
    %v184 = vld [vmem:[#allocation6 + $0x24] sm:$0xf]
    %v185 = vld [vmem:[#allocation6 + $0x28] sm:$0xf]
    %v186 = vld [vmem:[#allocation6 + $0x2c] sm:$0xf]
    %v187 = vld [vmem:[#allocation6 + $0x30] sm:$0xf]
    %v188 = vld [vmem:[#allocation6 + $0x34] sm:$0xf]
    %v189 = vld [vmem:[#allocation6 + $0x38] sm:$0xf]
    %v190 = vld [vmem:[#allocation6 + $0x3c] sm:$0xf]
    %v191 = vld [vmem:[%s4] sm:$0x1]
    %v193 = vlaneseq
    %v194 = vshrl.u32 %v193, 7
    %v195 = vsub.s32 0, %v194
    %v196 = vrot.slane %v191, %v195
    %v214 = vunpack.c.l.b16 %v175
    %v215 = vunpack.c.l.b16 %v176
    %v216 = vunpack.c.l.b16 %v177
    %v217 = vunpack.c.l.b16 %v178
    %v218 = vunpack.c.l.b16 %v179
    %v219 = vunpack.c.l.b16 %v180
    %v220 = vunpack.c.l.b16 %v181
    %v221 = vunpack.c.l.b16 %v182
    %v222 = vunpack.c.l.b16 %v183
    %v223 = vunpack.c.l.b16 %v184
    %v224 = vunpack.c.l.b16 %v185
    %v225 = vunpack.c.l.b16 %v186
    %v226 = vunpack.c.l.b16 %v187
    %v227 = vunpack.c.l.b16 %v188
    %v228 = vunpack.c.l.b16 %v189
    %v229 = vunpack.c.l.b16 %v190
    %v230 = vpack.c.b16 %v215, %v214
    %v231 = vpack.c.b16 %v217, %v216
    %v232 = vpack.c.b16 %v219, %v218
    %v233 = vpack.c.b16 %v221, %v220
    %v234 = vpack.c.b16 %v223, %v222
    %v235 = vpack.c.b16 %v225, %v224
    %v236 = vpack.c.b16 %v227, %v226
    %v237 = vpack.c.b16 %v229, %v228
    %246 = vmatprep.subr.bf16.mxu0 0
    %247 = vmatpush1.bf16.msra.mxu0 %v230
    %248 = vmatprep.subr.bf16.mxu0 0
    %249 = vmatpush1.bf16.msra.mxu0 %v231
    %250 = vmatprep.subr.bf16.mxu0 0
    %251 = vmatpush1.bf16.msra.mxu0 %v232
    %252 = vmatprep.subr.bf16.mxu0 0
    %253 = vmatpush1.bf16.msra.mxu0 %v233
    %254 = vmatprep.subr.bf16.mxu0 0
    %255 = vmatpush1.bf16.msra.mxu0 %v234
    %256 = vmatprep.subr.bf16.mxu0 0
    %257 = vmatpush1.bf16.msra.mxu0 %v235
    %258 = vmatprep.subr.bf16.mxu0 0
    %259 = vmatpush1.bf16.msra.mxu0 %v236
    %260 = vmatprep.subr.bf16.mxu0 0
    %261 = vmatpush1.bf16.msra.mxu0 %v237
    %262 = vmatprep.subr.bf16.mxu0 0
    %263 = vmatpush1.bf16.msra.mxu0 0
    %264 = vmatprep.subr.bf16.mxu0 0
    %265 = vmatpush1.bf16.msra.mxu0 0
    %266 = vmatprep.subr.bf16.mxu0 0
    %267 = vmatpush1.bf16.msra.mxu0 0
    %268 = vmatprep.subr.bf16.mxu0 0
    %269 = vmatpush1.bf16.msra.mxu0 0
    %270 = vmatprep.subr.bf16.mxu0 0
    %271 = vmatpush1.bf16.msra.mxu0 0
    %272 = vmatprep.subr.bf16.mxu0 0
    %273 = vmatpush1.bf16.msra.mxu0 0
    %274 = vmatprep.subr.bf16.mxu0 0
    %275 = vmatpush1.bf16.msra.mxu0 0
    %276 = vmatprep.subr.bf16.mxu0 0
    %277 = vmatpush1.bf16.msra.mxu0 0
    %278 = vmatprep.mubr.bf16.mxu0 0
    %279 = vmatmul.mubr.bf16.gmra.mrb[0].mxu0 %v174
    %v280 = vpop.f32.mrb[0].mxu0
    %v281 = vadd.f32 %v196, %v280
    %v282 = vpop.f32.mrb[0].mxu0
    %v283 = vpop.f32.mrb[0].mxu0
    %v284 = vpop.f32.mrb[0].mxu0
    %285 = vdwg.mxu0
    %286 = vst [vmem:[%s5] sm:$0xff] %v281
    // Predicated region
    $region34: #{classifier_head.1} parent=1 // pred_check
      _
    $region35: #{classifier_head.1} parent=1 // pred_check_branch
      %288 = sbr.rel (0) target = $region37
    $region36: #{classifier_head.1} parent=1 // pred_region
      _
    $region37: #{classifier_head.1} parent=1 // pred_fallthru
      _
    // Predicated region
    $region38: #{classifier_head.1} parent=1 // pred_check
      _
    $region39: #{classifier_head.1} parent=1 // pred_check_branch
      %290 = sbr.rel (0) target = $region41
    $region40: #{classifier_head.1} parent=1 // pred_region
      _
    $region41: #{classifier_head.1} parent=1 // pred_fallthru
      _
    %291 = vsyncpa [#allocation3], 1
    %292 = vsyncpa [#allocation5], 1

</llo_original>
